<compile_context>
chip_gen: v6e
topology: v6e:2x2x1
jax: 0.10.0
libtpu: 0.0.40
codegen_flags: <defaults>
</compile_context>

<pallas_src>
from functools import partial

import jax
import jax.numpy as jnp
from jax import lax
from jax.experimental import pallas as pl
from jax.experimental.pallas import tpu as pltpu


def _class_embed_kernel(idx_ref, table_ref, out_ref, *, n_classes_pad):
    """Vectorized embedding gather for one batch tile via a one-hot MXU matmul.

    idx_ref   : (tb, 1)            int32, VMEM  (final class index per row)
    table_ref : (n_pad, E_pad)     table dtype, VMEM (resident; block index never changes)
    out_ref   : (tb, E_pad)        table dtype, VMEM (lane/sublane-dense output block)
    """
    idx = idx_ref[...]                                               # (tb, 1) int32
    tb = idx.shape[0]
    # one-hot in the table dtype (bf16/f32) -> valid on the v7x MXU (no int path there)
    iota = lax.broadcasted_iota(jnp.int32, (tb, n_classes_pad), 1)   # lanes = class ids
    onehot = (iota == idx).astype(table_ref.dtype)                   # (tb, n_pad)
    # gather == one-hot @ table ; exact (each row sums exactly one table row)
    out_ref[...] = jnp.dot(
        onehot, table_ref[...], preferred_element_type=jnp.float32
    ).astype(out_ref.dtype)


def class_embedder_forward(class_idx, drop_flags, embedding_table):
    """class_idx: (B,) int, drop_flags: (B,) int (1 = drop -> unconditional class),
    embedding_table: (n_classes, E). Returns (B, 1, E) in the table dtype,
    matching torch ClassEmbedder.forward."""
    B = int(class_idx.shape[0])
    n_classes, embed_dim = embedding_table.shape
    dtype = embedding_table.dtype

    # ---- wrapper-side ucg select + clamp (B integers; negligible, removes in-kernel scalar work)
    uncond = jnp.int32(n_classes - 1)
    final_idx = jnp.where(drop_flags != 0, uncond, class_idx.astype(jnp.int32))
    final_idx = jnp.clip(final_idx, 0, uncond).astype(jnp.int32)

    # ---- lane padding: embed dim and class (contraction) dim up to multiples of 128
    e_pad = ((embed_dim + 127) // 128) * 128
    n_pad = ((n_classes + 127) // 128) * 128
    table = embedding_table
    if e_pad != embed_dim or n_pad != n_classes:
        table = jnp.pad(table, ((0, n_pad - n_classes), (0, e_pad - embed_dim)))

    # ---- sublane padding of the batch; one big tile for small/mid B (fewest grid steps),
    #      multiple "parallel" tiles only for large B (megacore on v7x).
    sub = max(8, 32 // jnp.dtype(dtype).itemsize)       # f32 -> 8, bf16 -> 16, int8/fp8 -> 32
    b_pad = ((B + sub - 1) // sub) * sub
    tb = min(b_pad, 256)
    b_pad = ((b_pad + tb - 1) // tb) * tb
    num_tiles = b_pad // tb

    idx2d = jnp.zeros((b_pad, 1), jnp.int32).at[:B, 0].set(final_idx)

    kernel = partial(_class_embed_kernel, n_classes_pad=int(n_pad))

    out2d = pl.pallas_call(
        kernel,
        out_shape=jax.ShapeDtypeStruct((b_pad, e_pad), dtype),
        grid_spec=pltpu.PrefetchScalarGridSpec(
            num_scalar_prefetch=0,
            grid=(num_tiles,),
            in_specs=[
                # final indices for this batch tile, lane/sublane resident in VMEM
                pl.BlockSpec((tb, 1), lambda t: (t, 0)),
                # whole (small) embedding table resident in VMEM; block index never changes
                pl.BlockSpec((n_pad, e_pad), lambda t: (0, 0)),
            ],
            out_specs=pl.BlockSpec((tb, e_pad), lambda t: (t, 0)),
        ),
        compiler_params=pltpu.CompilerParams(
            # batch tiles are fully independent -> shard grid steps across TensorCores on v7x
            dimension_semantics=("parallel",),
            vmem_limit_bytes=64 << 20,
        ),
    )(idx2d, table)

    # un-pad and add the singleton sequence dim (free reshape in the wrapper)
    return out2d[:B, :embed_dim][:, None, :]


if __name__ == "__main__":
    # module hyper-params (small, consistent with nn.Embedding(n_classes, embed_dim))
    N_CLASSES = 16
    EMBED_DIM = 128
    UCG_RATE = 0.1
    B = 4

    root = jax.random.PRNGKey(0)
    k_w, k_c, k_drop = jax.random.split(root, 3)

    # nn.Embedding default init ~ N(0, 1)
    embedding_table = jax.random.normal(k_w, (N_CLASSES, EMBED_DIM), dtype=jnp.float32)

    # batch['class'] : (B,) integer class labels
    class_idx = jax.random.randint(k_c, (B,), 0, N_CLASSES, dtype=jnp.int32)

    # torch.bernoulli(ones_like(c) * ucg_rate) -> 1 means "drop" (replace with n_classes-1).
    # Randomness drawn with JAX PRNG in the wrapper; select + gather handled by the kernel path.
    drop_flags = jax.random.bernoulli(k_drop, UCG_RATE, (B,)).astype(jnp.int32)

    out = class_embedder_forward(class_idx, drop_flags, embedding_table)
    out = jax.block_until_ready(out)

    # reference check in plain JAX
    final_idx = jnp.where(drop_flags != 0, N_CLASSES - 1, class_idx)
    ref = embedding_table[final_idx][:, None, :]
    assert out.shape == (B, 1, EMBED_DIM), out.shape
    assert out.dtype == embedding_table.dtype
    assert jnp.allclose(out, ref), "mismatch vs reference embedding lookup"

    print("KERNEL_OK")
</pallas_src>

<mosaic_0001>
module attributes {stable_mosaic.version = 11 : i64} {
  func.func @_class_embed_kernel(%arg0: i32, %arg1: memref<8x1xi32, #tpu.memory_space<vmem>>, %arg2: memref<128x128xf32, #tpu.memory_space<vmem>>, %arg3: memref<8x128xf32, #tpu.memory_space<vmem>>) attributes {dimension_semantics = [#tpu.dimension_semantics<parallel>], iteration_bounds = array<i64: 1>, scalar_prefetch = 0 : i64, scratch_operands = 0 : i64, tpu.core_type = #tpu.core_type<tc>, window_params = [{transform_indices = @transform_0, window_bounds = array<i64: 8, 1>}, {pipeline_mode = #tpu.pipeline_mode<synchronous>, transform_indices = @transform_1, window_bounds = array<i64: 128, 128>}, {transform_indices = @transform_2, window_bounds = array<i64: 8, 128>}]} {
    %c0 = arith.constant 0 : index
    %c0_0 = arith.constant 0 : index
    %0 = vector.load %arg1[%c0, %c0_0] : memref<8x1xi32, #tpu.memory_space<vmem>>, vector<8x1xi32>
    %1 = tpu.iota {dimensions = array<i32: 1>} : vector<8x128xi32>
    %2 = vector.broadcast %0 : vector<8x1xi32> to vector<8x128xi32>
    %3 = arith.cmpi eq, %1, %2 : vector<8x128xi32>
    %4 = arith.extui %3 : vector<8x128xi1> to vector<8x128xi32>
    %5 = arith.sitofp %4 : vector<8x128xi32> to vector<8x128xf32>
    %c0_1 = arith.constant 0 : index
    %c0_2 = arith.constant 0 : index
    %6 = vector.load %arg2[%c0_1, %c0_2] : memref<128x128xf32, #tpu.memory_space<vmem>>, vector<128x128xf32>
    %cst = arith.constant dense<0.000000e+00> : vector<8x128xf32>
    %7 = tpu.matmul %5, %6, %cst {dimension_numbers = #tpu.dot_dimension_numbers<[1], [0], [0], [1], [0, 0, 1, 1], [], []>} : vector<8x128xf32>, vector<128x128xf32>, vector<8x128xf32> -> vector<8x128xf32>
    %c0_3 = arith.constant 0 : index
    %c0_4 = arith.constant 0 : index
    %8 = vector.load %arg3[%c0_3, %c0_4] : memref<8x128xf32, #tpu.memory_space<vmem>>, vector<8x128xf32>
    tpu.vector_store %arg3[%c0_3, %c0_4], %7 {strides = array<i32>} : memref<8x128xf32, #tpu.memory_space<vmem>>, vector<8x128xf32>,
    return
  }
  func.func @transform_0(%arg0: i32) -> (i32, i32) {
    %c0_i32 = arith.constant 0 : i32
    %c0_i32_0 = arith.constant 0 : i32
    return %arg0, %c0_i32 : i32, i32
  }
  func.func @transform_1(%arg0: i32) -> (i32, i32) {
    %c0_i32 = arith.constant 0 : i32
    %c0_i32_0 = arith.constant 0 : i32
    %c0_i32_1 = arith.constant 0 : i32
    return %c0_i32, %c0_i32_0 : i32, i32
  }
  func.func @transform_2(%arg0: i32) -> (i32, i32) {
    %c0_i32 = arith.constant 0 : i32
    %c0_i32_0 = arith.constant 0 : i32
    return %arg0, %c0_i32 : i32, i32
  }
}

</mosaic_0001>

<llo_original>
// kernel: tpu_custom_call.1
$region0: #{tpu_custom_call.1}
  #allocation0 [shape = 'u32[]', space=smem, size = 0x4, offset = 0x4, fixed_abs, tag = 'smem constant byte address 0x4 - core index']
  #allocation1 [shape = 'u32[144,128]{1,0:T(1,128)}', space=vmem, size = 0x12000, scoped, tag = 'internal scratch']
  %s0 = inlined_call_operand.vmem [shape: s32[8,1], index: 0, kind: input, shape index: {}]
  %s1 = inlined_call_operand.hbm [shape: f32[128,128], index: 1, kind: input, shape index: {}]
  %s2 = inlined_call_operand.hbm [shape: f32[8,128], index: 2, kind: output, shape index: {}]
  %s3 = sld [smem:[#allocation0]]
  $region22: #{tpu_custom_call.1} parent=0
    _
  %s5 = ssub.s32 1, %s3
  %s6 = scalar_select 0, %s5, %s3
  $region1: #{tpu_custom_call.1} parent=0
    #allocation2 [shape = 'u8[65536]{0}', space=vmem, size = 0x10000, scoped, tag = 'input window, operand 1, single buffered']
    #allocation3 [shape = 's32[1]{0}', space=sflag, size = 0x4, scoped, tag = 'scoped memory for tpu_custom_call.1']
    #allocation4 [shape = 's32[1]{0}', space=sflag, size = 0x4, scoped, tag = 'scoped memory for tpu_custom_call.1']
    #allocation5 [shape = 'u8[4096]{0}', space=vmem, size = 0x1000, scoped, tag = 'output window, operand 0, single buffered']
    %7 = vsyncpa [#allocation3], 0
    %8 = vsyncpa [#allocation4], 0
    // Predicated region
    $region2: #{tpu_custom_call.1} parent=1 // pred_check
      _
    $region3: #{tpu_custom_call.1} parent=1 // pred_check_branch
      %10 = sbr.rel (0) target = $region5
    $region4: #{tpu_custom_call.1} parent=1 // pred_region
      _
    $region5: #{tpu_custom_call.1} parent=1 // pred_fallthru
      _
    // Predicated region
    $region6: #{tpu_custom_call.1} parent=1 // pred_check
      _
    $region7: #{tpu_custom_call.1} parent=1 // pred_check_branch
      %12 = sbr.rel (0) target = $region9
    $region8: #{tpu_custom_call.1} parent=1 // pred_region
      %s14 = ssub.s32 2048, 2048
      %15 = vsyncadd [#allocation3], %s14
      %s16 = sshll.u32 [#allocation2], 4
      %s17 = int_to_ptr.vmem [resolvable:$true] %s16
      %22 = dma.hbm_to_vmem [thread:$0]  %s1, 2048, %s17, [#allocation3], 128, 128, 8
    $region9: #{tpu_custom_call.1} parent=1 // pred_fallthru
      _
    // Predicated region
    $region10: #{tpu_custom_call.1} parent=1 // pred_check
      _
    $region11: #{tpu_custom_call.1} parent=1 // pred_check_branch
      %24 = sbr.rel (0) target = $region13
    $region12: #{tpu_custom_call.1} parent=1 // pred_region
      %25 = dma.done [#allocation3], 2048
    $region13: #{tpu_custom_call.1} parent=1 // pred_fallthru
      _
    %v26 = vld [vmem:[%s0] sm:$0xff]
    %v27 = vlaneseq
    %v28 = vand.u32 %v27, 127
    %29 = vset.pattern.permute.xlu0 0
    %30 = vperm.xlu0 %29, %v26
    %v31 = vpop.permute.xlu0 %30
    %vm32 = vcmp.eq.s32.totalorder %v28, %v31
    %v33 = vsel %vm32, 1, 0
    %v34 = vcvt.s32.f32 %v33
    %v35 = vld [vmem:[#allocation2] sm:$0xff]
    %v36 = vld [vmem:[#allocation2 + $0x8] sm:$0xff]
    %v37 = vld [vmem:[#allocation2 + $0x10] sm:$0xff]
    %v38 = vld [vmem:[#allocation2 + $0x18] sm:$0xff]
    %v39 = vld [vmem:[#allocation2 + $0x20] sm:$0xff]
    %v40 = vld [vmem:[#allocation2 + $0x28] sm:$0xff]
    %v41 = vld [vmem:[#allocation2 + $0x30] sm:$0xff]
    %v42 = vld [vmem:[#allocation2 + $0x38] sm:$0xff]
    %v43 = vld [vmem:[#allocation2 + $0x40] sm:$0xff]
    %v44 = vld [vmem:[#allocation2 + $0x48] sm:$0xff]
    %v45 = vld [vmem:[#allocation2 + $0x50] sm:$0xff]
    %v46 = vld [vmem:[#allocation2 + $0x58] sm:$0xff]
    %v47 = vld [vmem:[#allocation2 + $0x60] sm:$0xff]
    %v48 = vld [vmem:[#allocation2 + $0x68] sm:$0xff]
    %v49 = vld [vmem:[#allocation2 + $0x70] sm:$0xff]
    %v50 = vld [vmem:[#allocation2 + $0x78] sm:$0xff]
    %51 = vmatprep.subr.mxu0 0.0
    %52 = vmatpush1.msra.mxu0 %v50
    %53 = vmatprep.subr.mxu0 0.0
    %54 = vmatpush1.msra.mxu0 %v49
    %55 = vmatprep.subr.mxu0 0.0
    %56 = vmatpush1.msra.mxu0 %v48
    %57 = vmatprep.subr.mxu0 0.0
    %58 = vmatpush1.msra.mxu0 %v47
    %59 = vmatprep.subr.mxu0 0.0
    %60 = vmatpush1.msra.mxu0 %v46
    %61 = vmatprep.subr.mxu0 0.0
    %62 = vmatpush1.msra.mxu0 %v45
    %63 = vmatprep.subr.mxu0 0.0
    %64 = vmatpush1.msra.mxu0 %v44
    %65 = vmatprep.subr.mxu0 0.0
    %66 = vmatpush1.msra.mxu0 %v43
    %67 = vmatprep.subr.mxu0 0.0
    %68 = vmatpush1.msra.mxu0 %v42
    %69 = vmatprep.subr.mxu0 0.0
    %70 = vmatpush1.msra.mxu0 %v41
    %71 = vmatprep.subr.mxu0 0.0
    %72 = vmatpush1.msra.mxu0 %v40
    %73 = vmatprep.subr.mxu0 0.0
    %74 = vmatpush1.msra.mxu0 %v39
    %75 = vmatprep.subr.mxu0 0.0
    %76 = vmatpush1.msra.mxu0 %v38
    %77 = vmatprep.subr.mxu0 0.0
    %78 = vmatpush1.msra.mxu0 %v37
    %79 = vmatprep.subr.mxu0 0.0
    %80 = vmatpush1.msra.mxu0 %v36
    %81 = vmatprep.subr.mxu0 0.0
    %82 = vmatpush1.msra.mxu0 %v35
    %83 = vmatprep.subr.mxu0 0.0
    %84 = vmatpush2.msra.mxu0 0.0
    %85 = vmatprep.subr.mxu0 0.0
    %86 = vmatpush2.msra.mxu0 0.0
    %87 = vmatprep.subr.mxu0 0.0
    %88 = vmatpush2.msra.mxu0 0.0
    %89 = vmatprep.subr.mxu0 0.0
    %90 = vmatpush2.msra.mxu0 0.0
    %91 = vmatprep.subr.mxu0 0.0
    %92 = vmatpush2.msra.mxu0 0.0
    %93 = vmatprep.subr.mxu0 0.0
    %94 = vmatpush2.msra.mxu0 0.0
    %95 = vmatprep.subr.mxu0 0.0
    %96 = vmatpush2.msra.mxu0 0.0
    %97 = vmatprep.subr.mxu0 0.0
    %98 = vmatpush2.msra.mxu0 0.0
    %99 = vmatprep.subr.mxu0 0.0
    %100 = vmatpush2.msra.mxu0 0.0
    %101 = vmatprep.subr.mxu0 0.0
    %102 = vmatpush2.msra.mxu0 0.0
    %103 = vmatprep.subr.mxu0 0.0
    %104 = vmatpush2.msra.mxu0 0.0
    %105 = vmatprep.subr.mxu0 0.0
    %106 = vmatpush2.msra.mxu0 0.0
    %107 = vmatprep.subr.mxu0 0.0
    %108 = vmatpush2.msra.mxu0 0.0
    %109 = vmatprep.subr.mxu0 0.0
    %110 = vmatpush2.msra.mxu0 0.0
    %111 = vmatprep.subr.mxu0 0.0
    %112 = vmatpush2.msra.mxu0 0.0
    %113 = vmatprep.subr.mxu0 0.0
    %114 = vmatpush2.msra.mxu0 0.0
    %115 = vmatprep.mubr.f32.mxu0 0.0
    %116 = vmatmul.mubr.f32.gmra.mxu0 %v34
    %v117 = vpop.f32.mrf.mxu0
    %v118 = vadd.f32 0.0, %v117
    %v119 = vpop.f32.mrf.mxu0
    %120 = vdwg.mxu0
    %121 = vst [vmem:[#allocation5] sm:$0xff] %v118
    // Predicated region
    $region14: #{tpu_custom_call.1} parent=1 // pred_check
      _
    $region15: #{tpu_custom_call.1} parent=1 // pred_check_branch
      %123 = sbr.rel (0) target = $region17
    $region16: #{tpu_custom_call.1} parent=1 // pred_region
      %s125 = ssub.s32 128, 128
      %126 = vsyncadd [#allocation4], %s125
      %s128 = sshll.u32 [#allocation5], 4
      %s129 = int_to_ptr.vmem [resolvable:$true] %s128
      %131 = dma.vmem_to_hbm [thread:$0]  %s129, 128, %s2, [#allocation4]
    $region17: #{tpu_custom_call.1} parent=1 // pred_fallthru
      _
    // Predicated region
    $region18: #{tpu_custom_call.1} parent=1 // pred_check
      _
    $region19: #{tpu_custom_call.1} parent=1 // pred_check_branch
      %133 = sbr.rel (0) target = $region21
    $region20: #{tpu_custom_call.1} parent=1 // pred_region
      %134 = dma.done [#allocation4], 128
    $region21: #{tpu_custom_call.1} parent=1 // pred_fallthru
      _
    %135 = vsyncpa [#allocation3], 1
    %136 = vsyncpa [#allocation4], 1

</llo_original>
